<compile_context>
chip_gen: v6e
topology: v6e:2x2x1
jax: 0.10.0
libtpu: 0.0.40
codegen_flags: <defaults>
</compile_context>

<pallas_src>
import math

import jax
import jax.numpy as jnp
from jax import lax
from jax.experimental import pallas as pl
from jax.experimental.pallas import tpu as pltpu


def _round_up(x, m):
    return (x + m - 1) // m * m


def affinity_kernel(x1_ref, x2_ref, w1a_ref, w1b_ref, b1_ref, w2_ref, b2_ref, o_ref):
    # fc1, lane-dense formulation: h = relu(W1a @ x1^T + W1b @ x2^T + b1) -> (H, TN).
    # Contract the feature (last) dim of the row-major x tiles directly; the
    # per-tile relayout happens on VMEM data (XLU / vector-extended slots),
    # not as an extra HBM pass.
    dn = (((1,), (1,)), ((), ()))  # contract dim 1 of W with dim 1 (F) of the x tile
    h = lax.dot_general(w1a_ref[...], x1_ref[...], dn,
                        preferred_element_type=jnp.float32)
    h = h + lax.dot_general(w1b_ref[...], x2_ref[...], dn,
                            preferred_element_type=jnp.float32)
    h = jnp.maximum(h + b1_ref[...], 0.0)                      # (H, TN), f32
    # fc2 on the MXU (huge slack), sigmoid on the EUP (free slot): (1,H)@(H,TN)->(1,TN).
    logit = jnp.dot(w2_ref[...], h, preferred_element_type=jnp.float32) + b2_ref[0]
    o_ref[...] = jax.nn.sigmoid(logit)                          # lane-dense (1, TN)


def affinity_calculator(x1, x2, w1, b1, w2, b2, *, tile_n=8192):
    """
    x1, x2 : (..., F)  activations (read once, in their native dtype)
    w1     : (H, 2F)   PyTorch nn.Linear weight layout (out, in)
    b1     : (H,)
    w2     : (1, H)
    b2     : (1,)
    returns: (...,)    sigmoid affinity, last dim squeezed
    """
    lead_shape = x1.shape[:-1]
    F = x1.shape[-1]
    H = w1.shape[0]
    N = math.prod(lead_shape) if lead_shape else 1

    # Row-major (N, F) views — no concat/transpose/pad slab; the kernel reads
    # x1/x2 straight from HBM exactly once.
    x1r = x1.reshape(N, F)
    x2r = x2.reshape(N, F)
    cdt = x1r.dtype

    # Split W1 along its input dim: concat([x1,x2]) @ W1.T == W1a@x1^T + W1b@x2^T.
    # Cast weights to the activation dtype (bf16 inputs -> bf16 MXU matmul),
    # keep biases and accumulation in f32.
    w1a = w1[:, :F].astype(cdt)                 # (H, F)
    w1b = w1[:, F:].astype(cdt)                 # (H, F)
    b1c = b1.reshape(H, 1).astype(jnp.float32)  # (H, 1)
    w2f = w2.reshape(1, H).astype(jnp.float32)  # (1, H)
    b2s = b2.reshape(1).astype(jnp.float32)     # (1,) scalar -> SMEM

    # Row tiling: lane-aligned, >= 1 MiB of activations per step where possible,
    # and >= 2 grid steps (when N >= 256) so "parallel" can shard across the two
    # v7x TensorCores.  Balanced TN also limits tail-tile waste.
    n_lane = _round_up(N, 128)
    tile_n = _round_up(max(128, tile_n), 128)
    num_tiles = pl.cdiv(n_lane, tile_n)
    if num_tiles < 2 and n_lane >= 256:
        num_tiles = 2
    TN = _round_up(pl.cdiv(n_lane, num_tiles), 128)
    grid = (pl.cdiv(n_lane, TN),)
    n_out = grid[0] * TN   # output-only padding (1 row, negligible HBM)

    out = pl.pallas_call(
        affinity_kernel,
        out_shape=jax.ShapeDtypeStruct((1, n_out), jnp.float32),
        grid=grid,
        in_specs=[
            pl.BlockSpec((TN, F), lambda i: (i, 0)),   # x1 rows: tiled + pipelined
            pl.BlockSpec((TN, F), lambda i: (i, 0)),   # x2 rows: tiled + pipelined
            pl.BlockSpec((H, F), lambda i: (0, 0)),    # W1a: VMEM-resident
            pl.BlockSpec((H, F), lambda i: (0, 0)),    # W1b: VMEM-resident
            pl.BlockSpec((H, 1), lambda i: (0, 0)),    # b1:  VMEM-resident
            pl.BlockSpec((1, H), lambda i: (0, 0)),    # W2:  VMEM-resident
            pl.BlockSpec(memory_space=pltpu.MemorySpace.SMEM),  # b2: scalar in SMEM
        ],
        out_specs=pl.BlockSpec((1, TN), lambda i: (0, i)),      # lane-dense output row
        compiler_params=pltpu.CompilerParams(
            dimension_semantics=("parallel",),
            vmem_limit_bytes=32 * 1024 * 1024,   # ~6-8 MiB used at TN=8192; safe on v7x
        ),
    )(x1r, x2r, w1a, w1b, b1c, w2f, b2s)

    # Padded tail columns (if any) hold garbage from masked partial-block reads;
    # they are sliced off here — do not change this slice with the layout.
    return out[0, :N].reshape(lead_shape).astype(cdt)


def reference(x1, x2, w1, b1, w2, b2):
    f = jnp.concatenate([x1, x2], axis=-1)
    f = jax.nn.relu(f @ w1.T + b1)
    f = jax.nn.sigmoid(f @ w2.T + b2)
    return jnp.squeeze(f, axis=-1)


if __name__ == "__main__":
    # Small, lane-aligned demo: N = B*S = 256 rows -> TN = 128, a 2-step
    # "parallel" grid (exercises the pipeline / megacore split, no masking).
    B, S, FEAT, HID = 4, 64, 16, 64

    key = jax.random.PRNGKey(0)
    k1, k2, k3, k4, k5, k6 = jax.random.split(key, 6)

    x1 = jax.random.normal(k1, (B, S, FEAT), dtype=jnp.float32)
    x2 = jax.random.normal(k2, (B, S, FEAT), dtype=jnp.float32)

    # Deterministic synthetic parameters (PyTorch nn.Linear weight layout (out, in)).
    w1 = 0.1 * jax.random.normal(k3, (HID, 2 * FEAT), dtype=jnp.float32)
    b1 = 0.1 * jax.random.normal(k4, (HID,), dtype=jnp.float32)
    w2 = 0.1 * jax.random.normal(k5, (1, HID), dtype=jnp.float32)
    b2 = 0.1 * jax.random.normal(k6, (1,), dtype=jnp.float32)

    fn = jax.jit(affinity_calculator)   # weight split / reshapes fuse into the launch
    out = jax.block_until_ready(fn(x1, x2, w1, b1, w2, b2))

    ref = reference(x1, x2, w1, b1, w2, b2)
    assert out.shape == (B, S), out.shape
    assert jnp.allclose(out, ref, atol=1e-5, rtol=1e-5), "mismatch vs reference"

    print("KERNEL_OK")
</pallas_src>

<mosaic_0001>
module attributes {stable_mosaic.version = 11 : i64} {
  func.func @affinity_kernel(%arg0: i32, %arg1: memref<128x16xf32, #tpu.memory_space<vmem>>, %arg2: memref<128x16xf32, #tpu.memory_space<vmem>>, %arg3: memref<64x16xf32, #tpu.memory_space<vmem>>, %arg4: memref<64x16xf32, #tpu.memory_space<vmem>>, %arg5: memref<64x1xf32, #tpu.memory_space<vmem>>, %arg6: memref<1x64xf32, #tpu.memory_space<vmem>>, %arg7: memref<1xf32, #tpu.memory_space<smem>>, %arg8: memref<1x128xf32, #tpu.memory_space<vmem>>) attributes {dimension_semantics = [#tpu.dimension_semantics<parallel>], iteration_bounds = array<i64: 2>, scalar_prefetch = 0 : i64, scratch_operands = 0 : i64, tpu.core_type = #tpu.core_type<tc>, window_params = [{transform_indices = @transform_0, window_bounds = array<i64: 128, 16>}, {transform_indices = @transform_1, window_bounds = array<i64: 128, 16>}, {pipeline_mode = #tpu.pipeline_mode<synchronous>, transform_indices = @transform_2, window_bounds = array<i64: 64, 16>}, {pipeline_mode = #tpu.pipeline_mode<synchronous>, transform_indices = @transform_3, window_bounds = array<i64: 64, 16>}, {pipeline_mode = #tpu.pipeline_mode<synchronous>, transform_indices = @transform_4, window_bounds = array<i64: 64, 1>}, {pipeline_mode = #tpu.pipeline_mode<synchronous>, transform_indices = @transform_5, window_bounds = array<i64: 1, 64>}, {transform_indices = @transform_6, window_bounds = array<i64: 1>}, {transform_indices = @transform_7, window_bounds = array<i64: 1, 128>}]} {
    %c0 = arith.constant 0 : index
    %c0_0 = arith.constant 0 : index
    %0 = vector.load %arg3[%c0, %c0_0] : memref<64x16xf32, #tpu.memory_space<vmem>>, vector<64x16xf32>
    %c0_1 = arith.constant 0 : index
    %c0_2 = arith.constant 0 : index
    %1 = vector.load %arg1[%c0_1, %c0_2] : memref<128x16xf32, #tpu.memory_space<vmem>>, vector<128x16xf32>
    %cst = arith.constant dense<0.000000e+00> : vector<64x128xf32>
    %2 = tpu.matmul %0, %1, %cst {dimension_numbers = #tpu.dot_dimension_numbers<[1], [1], [0], [0], [0, 0, 1, 0], [], []>} : vector<64x16xf32>, vector<128x16xf32>, vector<64x128xf32> -> vector<64x128xf32>
    %c0_3 = arith.constant 0 : index
    %c0_4 = arith.constant 0 : index
    %3 = vector.load %arg4[%c0_3, %c0_4] : memref<64x16xf32, #tpu.memory_space<vmem>>, vector<64x16xf32>
    %c0_5 = arith.constant 0 : index
    %c0_6 = arith.constant 0 : index
    %4 = vector.load %arg2[%c0_5, %c0_6] : memref<128x16xf32, #tpu.memory_space<vmem>>, vector<128x16xf32>
    %cst_7 = arith.constant dense<0.000000e+00> : vector<64x128xf32>
    %5 = tpu.matmul %3, %4, %cst_7 {dimension_numbers = #tpu.dot_dimension_numbers<[1], [1], [0], [0], [0, 0, 1, 0], [], []>} : vector<64x16xf32>, vector<128x16xf32>, vector<64x128xf32> -> vector<64x128xf32>
    %6 = arith.addf %2, %5 : vector<64x128xf32>
    %c0_8 = arith.constant 0 : index
    %c0_9 = arith.constant 0 : index
    %7 = vector.load %arg5[%c0_8, %c0_9] : memref<64x1xf32, #tpu.memory_space<vmem>>, vector<64x1xf32>
    %8 = vector.broadcast %7 : vector<64x1xf32> to vector<64x128xf32>
    %9 = arith.addf %6, %8 : vector<64x128xf32>
    %cst_10 = arith.constant 0.000000e+00 : f32
    %10 = vector.broadcast %cst_10 : f32 to vector<64x128xf32>
    %11 = arith.maximumf %9, %10 : vector<64x128xf32>
    %c0_11 = arith.constant 0 : index
    %c0_12 = arith.constant 0 : index
    %12 = vector.load %arg6[%c0_11, %c0_12] : memref<1x64xf32, #tpu.memory_space<vmem>>, vector<1x64xf32>
    %cst_13 = arith.constant dense<0.000000e+00> : vector<1x128xf32>
    %13 = tpu.matmul %12, %11, %cst_13 {dimension_numbers = #tpu.dot_dimension_numbers<[1], [0], [0], [1], [0, 0, 1, 1], [], []>} : vector<1x64xf32>, vector<64x128xf32>, vector<1x128xf32> -> vector<1x128xf32>
    %c0_14 = arith.constant 0 : index
    %14 = memref.load %arg7[%c0_14] : memref<1xf32, #tpu.memory_space<smem>>
    %15 = vector.broadcast %14 : f32 to vector<1x128xf32>
    %16 = arith.addf %13, %15 : vector<1x128xf32>
    %17 = arith.negf %16 : vector<1x128xf32>
    %18 = math.exp %17 : vector<1x128xf32>
    %cst_15 = arith.constant 1.000000e+00 : f32
    %19 = vector.broadcast %cst_15 : f32 to vector<1x128xf32>
    %20 = arith.addf %19, %18 : vector<1x128xf32>
    %21 = arith.divf %19, %20 : vector<1x128xf32>
    %c0_16 = arith.constant 0 : index
    %c0_17 = arith.constant 0 : index
    %22 = vector.load %arg8[%c0_16, %c0_17] : memref<1x128xf32, #tpu.memory_space<vmem>>, vector<1x128xf32>
    tpu.vector_store %arg8[%c0_16, %c0_17], %21 {strides = array<i32>} : memref<1x128xf32, #tpu.memory_space<vmem>>, vector<1x128xf32>,
    return
  }
  func.func @transform_0(%arg0: i32) -> (i32, i32) {
    %c0_i32 = arith.constant 0 : i32
    %c0_i32_0 = arith.constant 0 : i32
    return %arg0, %c0_i32 : i32, i32
  }
  func.func @transform_1(%arg0: i32) -> (i32, i32) {
    %c0_i32 = arith.constant 0 : i32
    %c0_i32_0 = arith.constant 0 : i32
    return %arg0, %c0_i32 : i32, i32
  }
  func.func @transform_2(%arg0: i32) -> (i32, i32) {
    %c0_i32 = arith.constant 0 : i32
    %c0_i32_0 = arith.constant 0 : i32
    %c0_i32_1 = arith.constant 0 : i32
    return %c0_i32, %c0_i32_0 : i32, i32
  }
  func.func @transform_3(%arg0: i32) -> (i32, i32) {
    %c0_i32 = arith.constant 0 : i32
    %c0_i32_0 = arith.constant 0 : i32
    %c0_i32_1 = arith.constant 0 : i32
    return %c0_i32, %c0_i32_0 : i32, i32
  }
  func.func @transform_4(%arg0: i32) -> (i32, i32) {
    %c0_i32 = arith.constant 0 : i32
    %c0_i32_0 = arith.constant 0 : i32
    %c0_i32_1 = arith.constant 0 : i32
    return %c0_i32, %c0_i32_0 : i32, i32
  }
  func.func @transform_5(%arg0: i32) -> (i32, i32) {
    %c0_i32 = arith.constant 0 : i32
    %c0_i32_0 = arith.constant 0 : i32
    %c0_i32_1 = arith.constant 0 : i32
    return %c0_i32, %c0_i32_0 : i32, i32
  }
  func.func @transform_6(%arg0: i32) -> i32 {
    %c0_i32 = arith.constant 0 : i32
    %c0_i32_0 = arith.constant 0 : i32
    return %c0_i32 : i32
  }
  func.func @transform_7(%arg0: i32) -> (i32, i32) {
    %c0_i32 = arith.constant 0 : i32
    %c0_i32_0 = arith.constant 0 : i32
    return %c0_i32, %arg0 : i32, i32
  }
}

</mosaic_0001>

<llo_original>
// kernel: squeeze.1
$region0: #{squeeze.1}
  %s0 = inlined_call_operand.vmem [shape: f32[256], index: 0, kind: input, shape index: {}]
  %s1 = inlined_call_operand.hbm [shape: f32[4,64], index: 1, kind: output, shape index: {}]
  $region1: #{squeeze.1} parent=0
    #allocation0 [shape = 'u8[2048]{0}', space=vmem, size = 0x800, scoped, tag = 'operand span for operand 1']
    #allocation1 [shape = 's32[1]{0}', space=sflag, size = 0x4, scoped, tag = 'scoped memory for squeeze.1']
    #allocation2 [shape = 'u8[4096]{0}', space=vmem, size = 0x1000, scoped, tag = 'scoped mem for output reshape']
    #allocation3 [shape = 'u8[4096]{0}', space=vmem, size = 0x1000, scoped, tag = 'scoped mem for input reshape']
    %2 = vsyncpa [#allocation1], 0
    %s4 = sshll.u32 1, 2
    %s5 = ssub.s32 %s4, 1
    %v6 = vld [vmem:[%s0] sm:%s5]
    %7 = vst [vmem:[#allocation3] sm:%s5] %v6
    %v8 = vld [vmem:[#allocation3] sm:$0x3]
    %vm9 = vcmask 523264
    %10 = vst.msk [vmem:[#allocation2] ss:$2 sm:$0x3] %vm9, %v8
    %v11 = vld [vmem:[#allocation3] sm:$0x3]
    %12 = vrot.lane.b32.xlu0 %v11, 64
    %v13 = vpop.permute.xlu0 %12
    %vm14 = vcmask 523264
    %s15 = scalar_lea.vmem [#allocation2], 1
    %16 = vst.msk [vmem:[%s15] ss:$2 sm:$0x3] %vm14, %v13
    %s18 = sshll.u32 1, 4
    %s19 = ssub.s32 %s18, 1
    %v21 = vld [vmem:[#allocation2] sm:%s19]
    %s22 = sshll.u32 1, 4
    %s23 = ssub.s32 %s22, 1
    %24 = vst [vmem:[#allocation0] sm:%s23] %v21
    %s26 = ssub.s32 64, 64
    %27 = vsyncadd [#allocation1], %s26
    %s29 = sshll.u32 [#allocation0], 4
    %s30 = int_to_ptr.vmem [resolvable:$true] %s29
    %32 = dma.vmem_to_hbm [thread:$0]  %s30, 64, %s1, [#allocation1]
    %33 = dma.done [#allocation1], 64
    %34 = vsyncpa [#allocation1], 1

// kernel: affinity_calculator.1
$region0: #{affinity_calculator.1}
  #allocation0 [shape = 'u32[]', space=smem, size = 0x4, offset = 0x4, fixed_abs, tag = 'smem constant byte address 0x4 - core index']
  #allocation1 [shape = 'u32[144,128]{1,0:T(1,128)}', space=vmem, size = 0x12000, scoped, tag = 'internal scratch']
  #allocation2 [shape = 'f32[1]{0:T(128)S(6)}', space=smem, size = 0x200, scoped, tag = 'scoped memory for affinity_calculator.1']
  %s0 = inlined_call_operand.vmem [shape: f32[256,16], index: 0, kind: input, shape index: {}]
  %s1 = inlined_call_operand.vmem [shape: f32[256,16], index: 1, kind: input, shape index: {}]
  %s2 = inlined_call_operand.vmem [shape: f32[64,16], index: 2, kind: input, shape index: {}]
  %s3 = inlined_call_operand.vmem [shape: f32[64,16], index: 3, kind: input, shape index: {}]
  %s4 = inlined_call_operand.vmem [shape: f32[64,1], index: 4, kind: input, shape index: {}]
  %s5 = inlined_call_operand.vmem [shape: f32[1,64], index: 5, kind: input, shape index: {}]
  %s6 = inlined_call_operand.<no memory space> [shape: f32[1], index: 6, kind: input, shape index: {}]
  %s7 = inlined_call_operand.vmem [shape: f32[1,256], index: 7, kind: output, shape index: {}]
  %s8 = sld [smem:[#allocation0]]
  $region61: #{affinity_calculator.1} parent=0
    _
  %s10 = ssub.s32 1, %s8
  %s11 = scalar_select 0, %s10, %s8
  %12 = sst [smem:[#allocation2]] %s6
  loop: start=0, step=1, limit=4
  $region2: #{affinity_calculator.1} parent=0 // loop_pre_header
    _
  $region3: #{affinity_calculator.1} parent=0 // loop_header
    %s14 = sphi 0, %s18
    %p15 = scmp.ge.s32.totalorder %s14, 4
    %s24 = sphi 0, %s26
    %s27 = sphi 0, %s24
    %s28 = sphi 0, %s27
    %s44 = sphi 0, %s28
    %s50 = sphi 0, %s52
    %s53 = sphi 0, %s50
    %s54 = sphi 0, %s53
    %s70 = sphi 0, %s54
    %s74 = sphi 0, %s74
    %s76 = sphi 0, %s74
    %s77 = sphi 0, %s76
    %s91 = sphi 0, %s77
    %s95 = sphi 0, %s95
    %s97 = sphi 0, %s95
    %s98 = sphi 0, %s97
    %s112 = sphi 0, %s98
    %s116 = sphi 0, %s116
    %s118 = sphi 0, %s116
    %s119 = sphi 0, %s118
    %s133 = sphi 0, %s119
    %s137 = sphi 0, %s137
    %s139 = sphi 0, %s137
    %s140 = sphi 0, %s139
    %s154 = sphi 0, %s140
    %s158 = sphi 0, %s158
    %s160 = sphi 0, %s158
    %s161 = sphi 0, %s160
    %s175 = sphi 0, %s161
    %s181 = sphi 0, %s183
    %s184 = sphi 0, %s181
    %s185 = sphi 0, %s184
    %s201 = sphi 0, %s185
  $region4: #{affinity_calculator.1} parent=0 // loop_header_branch
    %17 = sbr.rel (%p15) target = $region8
  $region5: #{affinity_calculator.1} parent=0 // loop_body
    %s19 = ssub.s32 %s14, 1
    %s20 = ssub.s32 %s14, 2
    %s21 = sadd.s32 %s14, 1
    %s22 = ssub.s32 %s14, %s21
    %p23 = scmp.eq.s32.totalorder %s22, 0
    %s25 = sadd.s32 %s24, 1
    %s26 = scalar_select %p23, %s24, %s25
    %p29 = pneg %p23
    %p30 = scmp.eq.s32.totalorder %s14, 1
    %p31 = por %p29, %p30
    %p32 = scmp.ne.s32.totalorder %s24, %s27
    %p33 = scmp.eq.s32.totalorder %s14, 0
    %p34 = por %p32, %p33
    %p35 = scmp.ne.s32.totalorder %s24, %s27
    %p36 = scmp.eq.s32.totalorder %s19, 1
    %p37 = por %p35, %p36
    %p38 = scmp.ne.s32.totalorder %s27, %s28
    %p39 = scmp.eq.s32.totalorder %s19, 0
    %p40 = por %p38, %p39
    %p41 = scmp.ne.s32.totalorder %s27, %s28
    %p42 = scmp.eq.s32.totalorder %s20, 1
    %p43 = por %p41, %p42
    %p45 = scmp.ne.s32.totalorder %s28, %s44
    %p46 = scmp.eq.s32.totalorder %s20, 0
    %p47 = por %p45, %p46
    %s48 = ssub.s32 %s14, %s21
    %p49 = scmp.eq.s32.totalorder %s48, 0
    %s51 = sadd.s32 %s50, 1
    %s52 = scalar_select %p49, %s50, %s51
    %p55 = pneg %p49
    %p56 = scmp.eq.s32.totalorder %s14, 1
    %p57 = por %p55, %p56
    %p58 = scmp.ne.s32.totalorder %s50, %s53
    %p59 = scmp.eq.s32.totalorder %s14, 0
    %p60 = por %p58, %p59
    %p61 = scmp.ne.s32.totalorder %s50, %s53
    %p62 = scmp.eq.s32.totalorder %s19, 1
    %p63 = por %p61, %p62
    %p64 = scmp.ne.s32.totalorder %s53, %s54
    %p65 = scmp.eq.s32.totalorder %s19, 0
    %p66 = por %p64, %p65
    %p67 = scmp.ne.s32.totalorder %s53, %s54
    %p68 = scmp.eq.s32.totalorder %s20, 1
    %p69 = por %p67, %p68
    %p71 = scmp.ne.s32.totalorder %s54, %s70
    %p72 = scmp.eq.s32.totalorder %s20, 0
    %p73 = por %p71, %p72
    %s75 = sadd.s32 %s74, 1
    %p78 = scmp.eq.s32.totalorder %s14, 1
    %p79 = scmp.ne.s32.totalorder %s74, %s76
    %p80 = scmp.eq.s32.totalorder %s14, 0
    %p81 = por %p79, %p80
    %p82 = scmp.ne.s32.totalorder %s74, %s76
    %p83 = scmp.eq.s32.totalorder %s19, 1
    %p84 = por %p82, %p83
    %p85 = scmp.ne.s32.totalorder %s76, %s77
    %p86 = scmp.eq.s32.totalorder %s19, 0
    %p87 = por %p85, %p86
    %p88 = scmp.ne.s32.totalorder %s76, %s77
    %p89 = scmp.eq.s32.totalorder %s20, 1
    %p90 = por %p88, %p89
    %p92 = scmp.ne.s32.totalorder %s77, %s91
    %p93 = scmp.eq.s32.totalorder %s20, 0
    %p94 = por %p92, %p93
    %s96 = sadd.s32 %s95, 1
    %p99 = scmp.eq.s32.totalorder %s14, 1
    %p100 = scmp.ne.s32.totalorder %s95, %s97
    %p101 = scmp.eq.s32.totalorder %s14, 0
    %p102 = por %p100, %p101
    %p103 = scmp.ne.s32.totalorder %s95, %s97
    %p104 = scmp.eq.s32.totalorder %s19, 1
    %p105 = por %p103, %p104
    %p106 = scmp.ne.s32.totalorder %s97, %s98
    %p107 = scmp.eq.s32.totalorder %s19, 0
    %p108 = por %p106, %p107
    %p109 = scmp.ne.s32.totalorder %s97, %s98
    %p110 = scmp.eq.s32.totalorder %s20, 1
    %p111 = por %p109, %p110
    %p113 = scmp.ne.s32.totalorder %s98, %s112
    %p114 = scmp.eq.s32.totalorder %s20, 0
    %p115 = por %p113, %p114
    %s117 = sadd.s32 %s116, 1
    %p120 = scmp.eq.s32.totalorder %s14, 1
    %p121 = scmp.ne.s32.totalorder %s116, %s118
    %p122 = scmp.eq.s32.totalorder %s14, 0
    %p123 = por %p121, %p122
    %p124 = scmp.ne.s32.totalorder %s116, %s118
    %p125 = scmp.eq.s32.totalorder %s19, 1
    %p126 = por %p124, %p125
    %p127 = scmp.ne.s32.totalorder %s118, %s119
    %p128 = scmp.eq.s32.totalorder %s19, 0
    %p129 = por %p127, %p128
    %p130 = scmp.ne.s32.totalorder %s118, %s119
    %p131 = scmp.eq.s32.totalorder %s20, 1
    %p132 = por %p130, %p131
    %p134 = scmp.ne.s32.totalorder %s119, %s133
    %p135 = scmp.eq.s32.totalorder %s20, 0
    %p136 = por %p134, %p135
    %s138 = sadd.s32 %s137, 1
    %p141 = scmp.eq.s32.totalorder %s14, 1
    %p142 = scmp.ne.s32.totalorder %s137, %s139
    %p143 = scmp.eq.s32.totalorder %s14, 0
    %p144 = por %p142, %p143
    %p145 = scmp.ne.s32.totalorder %s137, %s139
    %p146 = scmp.eq.s32.totalorder %s19, 1
    %p147 = por %p145, %p146
    %p148 = scmp.ne.s32.totalorder %s139, %s140
    %p149 = scmp.eq.s32.totalorder %s19, 0
    %p150 = por %p148, %p149
    %p151 = scmp.ne.s32.totalorder %s139, %s140
    %p152 = scmp.eq.s32.totalorder %s20, 1
    %p153 = por %p151, %p152
    %p155 = scmp.ne.s32.totalorder %s140, %s154
    %p156 = scmp.eq.s32.totalorder %s20, 0
    %p157 = por %p155, %p156
    %s159 = sadd.s32 %s158, 1
    %p162 = scmp.eq.s32.totalorder %s14, 1
    %p163 = scmp.ne.s32.totalorder %s158, %s160
    %p164 = scmp.eq.s32.totalorder %s14, 0
    %p165 = por %p163, %p164
    %p166 = scmp.ne.s32.totalorder %s158, %s160
    %p167 = scmp.eq.s32.totalorder %s19, 1
    %p168 = por %p166, %p167
    %p169 = scmp.ne.s32.totalorder %s160, %s161
    %p170 = scmp.eq.s32.totalorder %s19, 0
    %p171 = por %p169, %p170
    %p172 = scmp.ne.s32.totalorder %s160, %s161
    %p173 = scmp.eq.s32.totalorder %s20, 1
    %p174 = por %p172, %p173
    %p176 = scmp.ne.s32.totalorder %s161, %s175
    %p177 = scmp.eq.s32.totalorder %s20, 0
    %p178 = por %p176, %p177
    %s179 = ssub.s32 %s14, %s21
    %p180 = scmp.eq.s32.totalorder %s179, 0
    %s182 = sadd.s32 %s181, 1
    %s183 = scalar_select %p180, %s181, %s182
    %p186 = pneg %p180
    %p187 = scmp.eq.s32.totalorder %s14, 1
    %p188 = por %p186, %p187
    %p189 = scmp.ne.s32.totalorder %s181, %s184
    %p190 = scmp.eq.s32.totalorder %s14, 0
    %p191 = por %p189, %p190
    %p192 = scmp.ne.s32.totalorder %s181, %s184
    %p193 = scmp.eq.s32.totalorder %s19, 1
    %p194 = por %p192, %p193
    %p195 = scmp.ne.s32.totalorder %s184, %s185
    %p196 = scmp.eq.s32.totalorder %s19, 0
    %p197 = por %p195, %p196
    %p198 = scmp.ne.s32.totalorder %s184, %s185
    %p199 = scmp.eq.s32.totalorder %s20, 1
    %p200 = por %p198, %p199
    %p202 = scmp.ne.s32.totalorder %s185, %s201
    %p203 = scmp.eq.s32.totalorder %s20, 0
    %p204 = por %p202, %p203
    %p205 = scmp.le.s32.totalorder 1, %s14
    %p206 = scmp.lt.s32.totalorder %s14, 3
    %p207 = pnand %p205, %p206
    %p208 = pneg %p207
    // Predicated region
    $region9: #{affinity_calculator.1} parent=5 // pred_check
      _
    $region10: #{affinity_calculator.1} parent=5 // pred_check_branch
      %210 = sbr.rel (%p207) target = $region12
    $region11: #{affinity_calculator.1} parent=5 // pred_region
      %s211 = ssub.s32 %s14, 1
      // Predicated region
      $region13: #{affinity_calculator.1} parent=11 // pred_check
        %p212 = pneg %p87
      $region14: #{affinity_calculator.1} parent=11 // pred_check_branch
        %214 = sbr.rel (%p212) target = $region16
      $region15: #{affinity_calculator.1} parent=11 // pred_region
        _
      $region16: #{affinity_calculator.1} parent=11 // pred_fallthru
        _
      // Predicated region
      $region17: #{affinity_calculator.1} parent=11 // pred_check
        %p215 = pneg %p108
      $region18: #{affinity_calculator.1} parent=11 // pred_check_branch
        %217 = sbr.rel (%p215) target = $region20
      $region19: #{affinity_calculator.1} parent=11 // pred_region
        _
      $region20: #{affinity_calculator.1} parent=11 // pred_fallthru
        _
      // Predicated region
      $region21: #{affinity_calculator.1} parent=11 // pred_check
        %p218 = pneg %p129
      $region22: #{affinity_calculator.1} parent=11 // pred_check_branch
        %220 = sbr.rel (%p218) target = $region24
      $region23: #{affinity_calculator.1} parent=11 // pred_region
        _
      $region24: #{affinity_calculator.1} parent=11 // pred_fallthru
        _
      // Predicated region
      $region25: #{affinity_calculator.1} parent=11 // pred_check
        %p221 = pneg %p150
      $region26: #{affinity_calculator.1} parent=11 // pred_check_branch
        %223 = sbr.rel (%p221) target = $region28
      $region27: #{affinity_calculator.1} parent=11 // pred_region
        _
      $region28: #{affinity_calculator.1} parent=11 // pred_fallthru
        _
      // Predicated region
      $region29: #{affinity_calculator.1} parent=11 // pred_check
        %p224 = pneg %p171
      $region30: #{affinity_calculator.1} parent=11 // pred_check_branch
        %226 = sbr.rel (%p224) target = $region32
      $region31: #{affinity_calculator.1} parent=11 // pred_region
        _
      $region32: #{affinity_calculator.1} parent=11 // pred_fallthru
        _
    $region12: #{affinity_calculator.1} parent=5 // pred_fallthru
      _
    %p227 = scmp.lt.s32.totalorder %s14, 2
    // Predicated region
    $region33: #{affinity_calculator.1} parent=5 // pred_check
      %p228 = pneg %p227
    $region34: #{affinity_calculator.1} parent=5 // pred_check_branch
      %230 = sbr.rel (%p228) target = $region36
    $region35: #{affinity_calculator.1} parent=5 // pred_region
      // Predicated region
      $region37: #{affinity_calculator.1} parent=35 // pred_check
        %p231 = pneg %p34
      $region38: #{affinity_calculator.1} parent=35 // pred_check_branch
        %233 = sbr.rel (%p231) target = $region40
      $region39: #{affinity_calculator.1} parent=35 // pred_region
        %s234 = smul.u32 16, %s14
        %p235 = scmp.lt.s32.totalorder %s234, 31
        %s236 = scalar_select %p235, %s234, 31
        %s237 = smul.addr %s236, 8
        %s238 = scalar_lea.vmem %s0, %s237
        %s239 = smul.u32 16, %s14
      $region40: #{affinity_calculator.1} parent=35 // pred_fallthru
        _
      // Predicated region
      $region41: #{affinity_calculator.1} parent=35 // pred_check
        %p240 = pneg %p60
      $region42: #{affinity_calculator.1} parent=35 // pred_check_branch
        %242 = sbr.rel (%p240) target = $region44
      $region43: #{affinity_calculator.1} parent=35 // pred_region
        %s243 = smul.u32 16, %s14
        %p244 = scmp.lt.s32.totalorder %s243, 31
        %s245 = scalar_select %p244, %s243, 31
        %s246 = smul.addr %s245, 8
        %s247 = scalar_lea.vmem %s1, %s246
        %s248 = smul.u32 16, %s14
      $region44: #{affinity_calculator.1} parent=35 // pred_fallthru
        _
    $region36: #{affinity_calculator.1} parent=5 // pred_fallthru
      _
    %p249 = scmp.le.s32.totalorder 1, %s14
    %p250 = scmp.lt.s32.totalorder %s14, 3
    %p251 = pnand %p249, %p250
    %p252 = pneg %p251
    // Predicated region
    $region45: #{affinity_calculator.1} parent=5 // pred_check
      _
    $region46: #{affinity_calculator.1} parent=5 // pred_check_branch
      %254 = sbr.rel (%p251) target = $region48
    $region47: #{affinity_calculator.1} parent=5 // pred_region
      %s255 = ssub.s32 %s14, 1
      %s256 = smul.u32 16, %s19
      %p257 = scmp.lt.s32.totalorder %s256, 31
      %s258 = scalar_select %p257, %s256, 31
      %s259 = smul.addr %s258, 8
      %s260 = scalar_lea.vmem %s0, %s259
      %p261 = pneg %p40
      %p262 = pneg %p37
      %s263 = smul.u32 16, %s19
      %p264 = scmp.lt.s32.totalorder %s263, 31
      %s265 = scalar_select %p264, %s263, 31
      %s266 = smul.addr %s265, 8
      %s267 = scalar_lea.vmem %s1, %s266
      %p268 = pneg %p66
      %p269 = pneg %p63
      %p270 = pneg %p87
      %p271 = pneg %p84
      %p272 = pneg %p108
      %p273 = pneg %p105
      %p274 = pneg %p129
      %p275 = pneg %p126
      %p276 = pneg %p150
      %p277 = pneg %p147
      %p278 = pneg %p171
      %p279 = pneg %p168
      %p280 = pneg %p197
      %p281 = pneg %p194
      %p282 = scmp.lt.s32.totalorder %s19, 1
      %s283 = scalar_select %p282, %s19, 1
      %s284 = scalar_lea.vmem %s7, %s283
      %s285 = smul.u32 16, %s19
      %p286 = scmp.lt.s32.totalorder %s285, 31
      %s287 = scalar_select %p286, %s285, 31
      %s288 = smul.addr %s287, 8
      %s289 = scalar_lea.vmem %s0, %s288
      %s290 = smul.u32 16, %s19
      %s291 = smul.u32 16, %s19
      %p292 = scmp.lt.s32.totalorder %s291, 31
      %s293 = scalar_select %p292, %s291, 31
      %s294 = smul.addr %s293, 8
      %s295 = scalar_lea.vmem %s1, %s294
      %s296 = smul.u32 16, %s19
      %p297 = scmp.lt.s32.totalorder %s19, 1
      %s298 = scalar_select %p297, %s19, 1
      %s299 = scalar_lea.vmem %s7, %s298
      %v300 = vld [vmem:[%s2] sm:$0xff]
      %v301 = vld [vmem:[%s2 + $0x8] sm:$0xff]
      %v302 = vld [vmem:[%s2 + $0x10] sm:$0xff]
      %v303 = vld [vmem:[%s2 + $0x18] sm:$0xff]
      %v304 = vld [vmem:[%s2 + $0x20] sm:$0xff]
      %v305 = vld [vmem:[%s2 + $0x28] sm:$0xff]
      %v306 = vld [vmem:[%s2 + $0x30] sm:$0xff]
      %v307 = vld [vmem:[%s2 + $0x38] sm:$0xff]
      %v308 = vld [vmem:[%s289] sm:$0xff]
      %v309 = vld [vmem:[%s289 + $0x8] sm:$0xff]
      %v310 = vld [vmem:[%s289 + $0x10] sm:$0xff]
      %v311 = vld [vmem:[%s289 + $0x18] sm:$0xff]
      %v312 = vld [vmem:[%s289 + $0x20] sm:$0xff]
      %v313 = vld [vmem:[%s289 + $0x28] sm:$0xff]
      %v314 = vld [vmem:[%s289 + $0x30] sm:$0xff]
      %v315 = vld [vmem:[%s289 + $0x38] sm:$0xff]
      %v316 = vld [vmem:[%s289 + $0x40] sm:$0xff]
      %v317 = vld [vmem:[%s289 + $0x48] sm:$0xff]
      %v318 = vld [vmem:[%s289 + $0x50] sm:$0xff]
      %v319 = vld [vmem:[%s289 + $0x58] sm:$0xff]
      %v320 = vld [vmem:[%s289 + $0x60] sm:$0xff]
      %v321 = vld [vmem:[%s289 + $0x68] sm:$0xff]
      %v322 = vld [vmem:[%s289 + $0x70] sm:$0xff]
      %v323 = vld [vmem:[%s289 + $0x78] sm:$0xff]
      %v324 = vld [vmem:[%s3] sm:$0xff]
      %v325 = vld [vmem:[%s3 + $0x8] sm:$0xff]
      %v326 = vld [vmem:[%s3 + $0x10] sm:$0xff]
      %v327 = vld [vmem:[%s3 + $0x18] sm:$0xff]
      %v328 = vld [vmem:[%s3 + $0x20] sm:$0xff]
      %v329 = vld [vmem:[%s3 + $0x28] sm:$0xff]
      %v330 = vld [vmem:[%s3 + $0x30] sm:$0xff]
      %v331 = vld [vmem:[%s3 + $0x38] sm:$0xff]
      %v332 = vld [vmem:[%s295] sm:$0xff]
      %v333 = vld [vmem:[%s295 + $0x8] sm:$0xff]
      %v334 = vld [vmem:[%s295 + $0x10] sm:$0xff]
      %v335 = vld [vmem:[%s295 + $0x18] sm:$0xff]
      %v336 = vld [vmem:[%s295 + $0x20] sm:$0xff]
      %v337 = vld [vmem:[%s295 + $0x28] sm:$0xff]
      %v338 = vld [vmem:[%s295 + $0x30] sm:$0xff]
      %v339 = vld [vmem:[%s295 + $0x38] sm:$0xff]
      %v340 = vld [vmem:[%s295 + $0x40] sm:$0xff]
      %v341 = vld [vmem:[%s295 + $0x48] sm:$0xff]
      %v342 = vld [vmem:[%s295 + $0x50] sm:$0xff]
      %v343 = vld [vmem:[%s295 + $0x58] sm:$0xff]
      %v344 = vld [vmem:[%s295 + $0x60] sm:$0xff]
      %v345 = vld [vmem:[%s295 + $0x68] sm:$0xff]
      %v346 = vld [vmem:[%s295 + $0x70] sm:$0xff]
      %v347 = vld [vmem:[%s295 + $0x78] sm:$0xff]
      %vm348 = vcmask 130048
      %v350 = vsel %vm348, %v324, 0
      %v353 = vsel %vm348, %v325, 0
      %v356 = vsel %vm348, %v326, 0
      %v359 = vsel %vm348, %v327, 0
      %v362 = vsel %vm348, %v328, 0
      %v365 = vsel %vm348, %v329, 0
      %v368 = vsel %vm348, %v330, 0
      %v371 = vsel %vm348, %v331, 0
      %v374 = vsel %vm348, %v332, 0
      %v377 = vsel %vm348, %v333, 0
      %v380 = vsel %vm348, %v334, 0
      %v383 = vsel %vm348, %v335, 0
      %v386 = vsel %vm348, %v336, 0
      %v389 = vsel %vm348, %v337, 0
      %v392 = vsel %vm348, %v338, 0
      %v395 = vsel %vm348, %v339, 0
      %v398 = vsel %vm348, %v340, 0
      %v401 = vsel %vm348, %v341, 0
      %v404 = vsel %vm348, %v342, 0
      %v407 = vsel %vm348, %v343, 0
      %v410 = vsel %vm348, %v344, 0
      %v413 = vsel %vm348, %v345, 0
      %v416 = vsel %vm348, %v346, 0
      %v419 = vsel %vm348, %v347, 0
      %421 = vmatprep.subr.mxu0 0.0
      %422 = vmatpush1.xpose.msra.mxu0 %v419
      %423 = vmatprep.subr.mxu0 0.0
      %424 = vmatpush1.xpose.msra.mxu0 %v416
      %425 = vmatprep.subr.mxu0 0.0
      %426 = vmatpush1.xpose.msra.mxu0 %v413
      %427 = vmatprep.subr.mxu0 0.0
      %428 = vmatpush1.xpose.msra.mxu0 %v410
      %429 = vmatprep.subr.mxu0 0.0
      %430 = vmatpush1.xpose.msra.mxu0 %v407
      %431 = vmatprep.subr.mxu0 0.0
      %432 = vmatpush1.xpose.msra.mxu0 %v404
      %433 = vmatprep.subr.mxu0 0.0
      %434 = vmatpush1.xpose.msra.mxu0 %v401
      %435 = vmatprep.subr.mxu0 0.0
      %436 = vmatpush1.xpose.msra.mxu0 %v398
      %437 = vmatprep.subr.mxu0 0.0
      %438 = vmatpush1.xpose.msra.mxu0 %v395
      %439 = vmatprep.subr.mxu0 0.0
      %440 = vmatpush1.xpose.msra.mxu0 %v392
      %441 = vmatprep.subr.mxu0 0.0
      %442 = vmatpush1.xpose.msra.mxu0 %v389
      %443 = vmatprep.subr.mxu0 0.0
      %444 = vmatpush1.xpose.msra.mxu0 %v386
      %445 = vmatprep.subr.mxu0 0.0
      %446 = vmatpush1.xpose.msra.mxu0 %v383
      %447 = vmatprep.subr.mxu0 0.0
      %448 = vmatpush1.xpose.msra.mxu0 %v380
      %449 = vmatprep.subr.mxu0 0.0
      %450 = vmatpush1.xpose.msra.mxu0 %v377
      %451 = vmatprep.subr.mxu0 0.0
      %452 = vmatpush1.xpose.msra.mxu0 %v374
      %453 = vmatprep.subr.mxu0 0.0
      %454 = vmatpush2.xpose.msra.mxu0 0.0
      %455 = vmatprep.subr.mxu0 0.0
      %456 = vmatpush2.xpose.msra.mxu0 0.0
      %457 = vmatprep.subr.mxu0 0.0
      %458 = vmatpush2.xpose.msra.mxu0 0.0
      %459 = vmatprep.subr.mxu0 0.0
      %460 = vmatpush2.xpose.msra.mxu0 0.0
      %461 = vmatprep.subr.mxu0 0.0
      %462 = vmatpush2.xpose.msra.mxu0 0.0
      %463 = vmatprep.subr.mxu0 0.0
      %464 = vmatpush2.xpose.msra.mxu0 0.0
      %465 = vmatprep.subr.mxu0 0.0
      %466 = vmatpush2.xpose.msra.mxu0 0.0
      %467 = vmatprep.subr.mxu0 0.0
      %468 = vmatpush2.xpose.msra.mxu0 0.0
      %469 = vmatprep.subr.mxu0 0.0
      %470 = vmatpush2.xpose.msra.mxu0 0.0
      %471 = vmatprep.subr.mxu0 0.0
      %472 = vmatpush2.xpose.msra.mxu0 0.0
      %473 = vmatprep.subr.mxu0 0.0
      %474 = vmatpush2.xpose.msra.mxu0 0.0
      %475 = vmatprep.subr.mxu0 0.0
      %476 = vmatpush2.xpose.msra.mxu0 0.0
      %477 = vmatprep.subr.mxu0 0.0
      %478 = vmatpush2.xpose.msra.mxu0 0.0
      %479 = vmatprep.subr.mxu0 0.0
      %480 = vmatpush2.xpose.msra.mxu0 0.0
      %481 = vmatprep.subr.mxu0 0.0
      %482 = vmatpush2.xpose.msra.mxu0 0.0
      %483 = vmatprep.subr.mxu0 0.0
      %484 = vmatpush2.xpose.msra.mxu0 0.0
      %485 = vmatprep.mubr.f32.mxu0 0.0
      %486 = vmatmul.mubr.f32.gmra.mxu0 %v350
      %v487 = vpop.f32.mrf.mxu0
      %v488 = vadd.f32 0.0, %v487
      %v489 = vpop.f32.mrf.mxu0
      %490 = vmatprep.mubr.f32.mxu0 0.0
      %491 = vmatmul.mubr.f32.gmra.mxu0 %v353
      %v492 = vpop.f32.mrf.mxu0
      %v493 = vadd.f32 0.0, %v492
      %v494 = vpop.f32.mrf.mxu0
      %495 = vmatprep.mubr.f32.mxu0 0.0
      %496 = vmatmul.mubr.f32.gmra.mxu0 %v356
      %v497 = vpop.f32.mrf.mxu0
      %v498 = vadd.f32 0.0, %v497
      %v499 = vpop.f32.mrf.mxu0
      %500 = vmatprep.mubr.f32.mxu0 0.0
      %501 = vmatmul.mubr.f32.gmra.mxu0 %v359
      %v502 = vpop.f32.mrf.mxu0
      %v503 = vadd.f32 0.0, %v502
      %v504 = vpop.f32.mrf.mxu0
      %505 = vmatprep.mubr.f32.mxu0 0.0
      %506 = vmatmul.mubr.f32.gmra.mxu0 %v362
      %v507 = vpop.f32.mrf.mxu0
      %v508 = vadd.f32 0.0, %v507
      %v509 = vpop.f32.mrf.mxu0
      %510 = vmatprep.mubr.f32.mxu0 0.0
      %511 = vmatmul.mubr.f32.gmra.mxu0 %v365
      %v512 = vpop.f32.mrf.mxu0
      %v513 = vadd.f32 0.0, %v512
      %v514 = vpop.f32.mrf.mxu0
      %515 = vmatprep.mubr.f32.mxu0 0.0
      %516 = vmatmul.mubr.f32.gmra.mxu0 %v368
      %v517 = vpop.f32.mrf.mxu0
      %v518 = vadd.f32 0.0, %v517
      %v519 = vpop.f32.mrf.mxu0
      %520 = vmatprep.mubr.f32.mxu0 0.0
      %521 = vmatmul.mubr.f32.gmra.mxu0 %v371
      %v522 = vpop.f32.mrf.mxu0
      %v523 = vadd.f32 0.0, %v522
      %v524 = vpop.f32.mrf.mxu0
      %525 = vdwg.mxu0
      %v527 = vsel %vm348, %v300, 0
      %v530 = vsel %vm348, %v301, 0
      %v533 = vsel %vm348, %v302, 0
      %v536 = vsel %vm348, %v303, 0
      %v539 = vsel %vm348, %v304, 0
      %v542 = vsel %vm348, %v305, 0
      %v545 = vsel %vm348, %v306, 0
      %v548 = vsel %vm348, %v307, 0
      %v551 = vsel %vm348, %v308, 0
      %v554 = vsel %vm348, %v309, 0
      %v557 = vsel %vm348, %v310, 0
      %v560 = vsel %vm348, %v311, 0
      %v563 = vsel %vm348, %v312, 0
      %v566 = vsel %vm348, %v313, 0
      %v569 = vsel %vm348, %v314, 0
      %v572 = vsel %vm348, %v315, 0
      %v575 = vsel %vm348, %v316, 0
      %v578 = vsel %vm348, %v317, 0
      %v581 = vsel %vm348, %v318, 0
      %v584 = vsel %vm348, %v319, 0
      %v587 = vsel %vm348, %v320, 0
      %v590 = vsel %vm348, %v321, 0
      %v593 = vsel %vm348, %v322, 0
      %v596 = vsel %vm348, %v323, 0
      %598 = vmatprep.subr.mxu0 0.0
      %599 = vmatpush1.xpose.msra.mxu0 %v596
      %600 = vmatprep.subr.mxu0 0.0
      %601 = vmatpush1.xpose.msra.mxu0 %v593
      %602 = vmatprep.subr.mxu0 0.0
      %603 = vmatpush1.xpose.msra.mxu0 %v590
      %604 = vmatprep.subr.mxu0 0.0
      %605 = vmatpush1.xpose.msra.mxu0 %v587
      %606 = vmatprep.subr.mxu0 0.0
      %607 = vmatpush1.xpose.msra.mxu0 %v584
      %608 = vmatprep.subr.mxu0 0.0
      %609 = vmatpush1.xpose.msra.mxu0 %v581
      %610 = vmatprep.subr.mxu0 0.0
      %611 = vmatpush1.xpose.msra.mxu0 %v578
      %612 = vmatprep.subr.mxu0 0.0
      %613 = vmatpush1.xpose.msra.mxu0 %v575
      %614 = vmatprep.subr.mxu0 0.0
      %615 = vmatpush1.xpose.msra.mxu0 %v572
      %616 = vmatprep.subr.mxu0 0.0
      %617 = vmatpush1.xpose.msra.mxu0 %v569
      %618 = vmatprep.subr.mxu0 0.0
      %619 = vmatpush1.xpose.msra.mxu0 %v566
      %620 = vmatprep.subr.mxu0 0.0
      %621 = vmatpush1.xpose.msra.mxu0 %v563
      %622 = vmatprep.subr.mxu0 0.0
      %623 = vmatpush1.xpose.msra.mxu0 %v560
      %624 = vmatprep.subr.mxu0 0.0
      %625 = vmatpush1.xpose.msra.mxu0 %v557
      %626 = vmatprep.subr.mxu0 0.0
      %627 = vmatpush1.xpose.msra.mxu0 %v554
      %628 = vmatprep.subr.mxu0 0.0
      %629 = vmatpush1.xpose.msra.mxu0 %v551
      %630 = vmatprep.subr.mxu0 0.0
      %631 = vmatpush2.xpose.msra.mxu0 0.0
      %632 = vmatprep.subr.mxu0 0.0
      %633 = vmatpush2.xpose.msra.mxu0 0.0
      %634 = vmatprep.subr.mxu0 0.0
      %635 = vmatpush2.xpose.msra.mxu0 0.0
      %636 = vmatprep.subr.mxu0 0.0
      %637 = vmatpush2.xpose.msra.mxu0 0.0
      %638 = vmatprep.subr.mxu0 0.0
      %639 = vmatpush2.xpose.msra.mxu0 0.0
      %640 = vmatprep.subr.mxu0 0.0
      %641 = vmatpush2.xpose.msra.mxu0 0.0
      %642 = vmatprep.subr.mxu0 0.0
      %643 = vmatpush2.xpose.msra.mxu0 0.0
      %644 = vmatprep.subr.mxu0 0.0
      %645 = vmatpush2.xpose.msra.mxu0 0.0
      %646 = vmatprep.subr.mxu0 0.0
      %647 = vmatpush2.xpose.msra.mxu0 0.0
      %648 = vmatprep.subr.mxu0 0.0
      %649 = vmatpush2.xpose.msra.mxu0 0.0
      %650 = vmatprep.subr.mxu0 0.0
      %651 = vmatpush2.xpose.msra.mxu0 0.0
      %652 = vmatprep.subr.mxu0 0.0
      %653 = vmatpush2.xpose.msra.mxu0 0.0
      %654 = vmatprep.subr.mxu0 0.0
      %655 = vmatpush2.xpose.msra.mxu0 0.0
      %656 = vmatprep.subr.mxu0 0.0
      %657 = vmatpush2.xpose.msra.mxu0 0.0
      %658 = vmatprep.subr.mxu0 0.0
      %659 = vmatpush2.xpose.msra.mxu0 0.0
      %660 = vmatprep.subr.mxu0 0.0
      %661 = vmatpush2.xpose.msra.mxu0 0.0
      %662 = vmatprep.mubr.f32.mxu0 0.0
      %663 = vmatmul.mubr.f32.gmra.mxu0 %v527
      %v664 = vpop.f32.mrf.mxu0
      %v665 = vadd.f32 %v488, %v664
      %v666 = vpop.f32.mrf.mxu0
      %667 = vmatprep.mubr.f32.mxu0 0.0
      %668 = vmatmul.mubr.f32.gmra.mxu0 %v530
      %v669 = vpop.f32.mrf.mxu0
      %v670 = vadd.f32 %v493, %v669
      %v671 = vpop.f32.mrf.mxu0
      %672 = vmatprep.mubr.f32.mxu0 0.0
      %673 = vmatmul.mubr.f32.gmra.mxu0 %v533
      %v674 = vpop.f32.mrf.mxu0
      %v675 = vadd.f32 %v498, %v674
      %v676 = vpop.f32.mrf.mxu0
      %677 = vmatprep.mubr.f32.mxu0 0.0
      %678 = vmatmul.mubr.f32.gmra.mxu0 %v536
      %v679 = vpop.f32.mrf.mxu0
      %v680 = vadd.f32 %v503, %v679
      %v681 = vpop.f32.mrf.mxu0
      %682 = vmatprep.mubr.f32.mxu0 0.0
      %683 = vmatmul.mubr.f32.gmra.mxu0 %v539
      %v684 = vpop.f32.mrf.mxu0
      %v685 = vadd.f32 %v508, %v684
      %v686 = vpop.f32.mrf.mxu0
      %687 = vmatprep.mubr.f32.mxu0 0.0
      %688 = vmatmul.mubr.f32.gmra.mxu0 %v542
      %v689 = vpop.f32.mrf.mxu0
      %v690 = vadd.f32 %v513, %v689
      %v691 = vpop.f32.mrf.mxu0
      %692 = vmatprep.mubr.f32.mxu0 0.0
      %693 = vmatmul.mubr.f32.gmra.mxu0 %v545
      %v694 = vpop.f32.mrf.mxu0
      %v695 = vadd.f32 %v518, %v694
      %v696 = vpop.f32.mrf.mxu0
      %697 = vmatprep.mubr.f32.mxu0 0.0
      %698 = vmatmul.mubr.f32.gmra.mxu0 %v548
      %v699 = vpop.f32.mrf.mxu0
      %v700 = vadd.f32 %v523, %v699
      %v701 = vpop.f32.mrf.mxu0
      %702 = vdwg.mxu0
      %v703 = vld [vmem:[%s4] sm:$0xff]
      %v704 = vld [vmem:[%s4 + $0x8] sm:$0xff]
      %v705 = vld [vmem:[%s4 + $0x10] sm:$0xff]
      %v706 = vld [vmem:[%s4 + $0x18] sm:$0xff]
      %v707 = vld [vmem:[%s4 + $0x20] sm:$0xff]
      %v708 = vld [vmem:[%s4 + $0x28] sm:$0xff]
      %v709 = vld [vmem:[%s4 + $0x30] sm:$0xff]
      %v710 = vld [vmem:[%s4 + $0x38] sm:$0xff]
      %712 = vset.pattern.permute.xlu0 0
      %713 = vperm.xlu0 %712, %v703
      %v714 = vpop.permute.xlu0 %713
      %717 = vset.pattern.permute.xlu0 0
      %718 = vperm.xlu0 %717, %v704
      %v719 = vpop.permute.xlu0 %718
      %722 = vset.pattern.permute.xlu0 0
      %723 = vperm.xlu0 %722, %v705
      %v724 = vpop.permute.xlu0 %723
      %727 = vset.pattern.permute.xlu0 0
      %728 = vperm.xlu0 %727, %v706
      %v729 = vpop.permute.xlu0 %728
      %732 = vset.pattern.permute.xlu0 0
      %733 = vperm.xlu0 %732, %v707
      %v734 = vpop.permute.xlu0 %733
      %737 = vset.pattern.permute.xlu0 0
      %738 = vperm.xlu0 %737, %v708
      %v739 = vpop.permute.xlu0 %738
      %742 = vset.pattern.permute.xlu0 0
      %743 = vperm.xlu0 %742, %v709
      %v744 = vpop.permute.xlu0 %743
      %747 = vset.pattern.permute.xlu0 0
      %748 = vperm.xlu0 %747, %v710
      %v749 = vpop.permute.xlu0 %748
      %v751 = vadd.f32 %v665, %v714
      %v752 = vadd.f32 %v670, %v719
      %v753 = vadd.f32 %v675, %v724
      %v754 = vadd.f32 %v680, %v729
      %v755 = vadd.f32 %v685, %v734
      %v756 = vadd.f32 %v690, %v739
      %v757 = vadd.f32 %v695, %v744
      %v758 = vadd.f32 %v700, %v749
      %v759 = vmax.f32 %v751, 0.0
      %v760 = vmax.f32 %v752, 0.0
      %v761 = vmax.f32 %v753, 0.0
      %v762 = vmax.f32 %v754, 0.0
      %v763 = vmax.f32 %v755, 0.0
      %v764 = vmax.f32 %v756, 0.0
      %v765 = vmax.f32 %v757, 0.0
      %v766 = vmax.f32 %v758, 0.0
      %v767 = vld [vmem:[%s5] sm:$0x1]
      %s768 = sld [smem:[#allocation2]]
      %v769 = vstv %s768
      %vm770 = vcmask 523264
      %v772 = vsel %vm770, %v767, 0
      %774 = vmatprep.subr.mxu0 0.0
      %775 = vmatpush1.msra.mxu0 0.0
      %776 = vmatprep.subr.mxu0 0.0
      %777 = vmatpush1.msra.mxu0 0.0
      %778 = vmatprep.subr.mxu0 0.0
      %779 = vmatpush1.msra.mxu0 0.0
      %780 = vmatprep.subr.mxu0 0.0
      %781 = vmatpush1.msra.mxu0 0.0
      %782 = vmatprep.subr.mxu0 0.0
      %783 = vmatpush1.msra.mxu0 0.0
      %784 = vmatprep.subr.mxu0 0.0
      %785 = vmatpush1.msra.mxu0 0.0
      %786 = vmatprep.subr.mxu0 0.0
      %787 = vmatpush1.msra.mxu0 0.0
      %788 = vmatprep.subr.mxu0 0.0
      %789 = vmatpush1.msra.mxu0 0.0
      %790 = vmatprep.subr.mxu0 0.0
      %791 = vmatpush1.msra.mxu0 %v766
      %792 = vmatprep.subr.mxu0 0.0
      %793 = vmatpush1.msra.mxu0 %v765
      %794 = vmatprep.subr.mxu0 0.0
      %795 = vmatpush1.msra.mxu0 %v764
      %796 = vmatprep.subr.mxu0 0.0
      %797 = vmatpush1.msra.mxu0 %v763
      %798 = vmatprep.subr.mxu0 0.0
      %799 = vmatpush1.msra.mxu0 %v762
      %800 = vmatprep.subr.mxu0 0.0
      %801 = vmatpush1.msra.mxu0 %v761
      %802 = vmatprep.subr.mxu0 0.0
      %803 = vmatpush1.msra.mxu0 %v760
      %804 = vmatprep.subr.mxu0 0.0
      %805 = vmatpush1.msra.mxu0 %v759
      %806 = vmatprep.subr.mxu0 0.0
      %807 = vmatpush2.msra.mxu0 0.0
      %808 = vmatprep.subr.mxu0 0.0
      %809 = vmatpush2.msra.mxu0 0.0
      %810 = vmatprep.subr.mxu0 0.0
      %811 = vmatpush2.msra.mxu0 0.0
      %812 = vmatprep.subr.mxu0 0.0
      %813 = vmatpush2.msra.mxu0 0.0
      %814 = vmatprep.subr.mxu0 0.0
      %815 = vmatpush2.msra.mxu0 0.0
      %816 = vmatprep.subr.mxu0 0.0
      %817 = vmatpush2.msra.mxu0 0.0
      %818 = vmatprep.subr.mxu0 0.0
      %819 = vmatpush2.msra.mxu0 0.0
      %820 = vmatprep.subr.mxu0 0.0
      %821 = vmatpush2.msra.mxu0 0.0
      %822 = vmatprep.subr.mxu0 0.0
      %823 = vmatpush2.msra.mxu0 0.0
      %824 = vmatprep.subr.mxu0 0.0
      %825 = vmatpush2.msra.mxu0 0.0
      %826 = vmatprep.subr.mxu0 0.0
      %827 = vmatpush2.msra.mxu0 0.0
      %828 = vmatprep.subr.mxu0 0.0
      %829 = vmatpush2.msra.mxu0 0.0
      %830 = vmatprep.subr.mxu0 0.0
      %831 = vmatpush2.msra.mxu0 0.0
      %832 = vmatprep.subr.mxu0 0.0
      %833 = vmatpush2.msra.mxu0 0.0
      %834 = vmatprep.subr.mxu0 0.0
      %835 = vmatpush2.msra.mxu0 0.0
      %836 = vmatprep.subr.mxu0 0.0
      %837 = vmatpush2.msra.mxu0 0.0
      %838 = vmatprep.mubr.f32.mxu0 0.0
      %839 = vmatmul.mubr.f32.gmra.mxu0 %v772
      %v840 = vpop.f32.mrf.mxu0
      %v841 = vadd.f32 %v769, %v840
      %v842 = vpop.f32.mrf.mxu0
      %843 = vdwg.mxu0
      %v844 = vxor.u32 %v841, 2147483648
      %v845 = vmul.f32 %v844, 1.442695
      %v846 = vpow.pop %v845
      %v847 = vadd.f32 %v846, 1.0
      %v848 = vrcp.pop %v847
      %v849 = vmul.f32 1.0, %v848
      %850 = vst [vmem:[%s299] sm:$0x1] %v849
      %p851 = scmp.lt.s32.totalorder %s19, 1
      %s852 = scalar_select %p851, %s19, 1
      %s853 = scalar_lea.vmem %s7, %s852
      // Predicated region
      $region49: #{affinity_calculator.1} parent=47 // pred_check
        %p854 = pneg %p194
      $region50: #{affinity_calculator.1} parent=47 // pred_check_branch
        %856 = sbr.rel (%p854) target = $region52
      $region51: #{affinity_calculator.1} parent=47 // pred_region
        _
      $region52: #{affinity_calculator.1} parent=47 // pred_fallthru
        _
    $region48: #{affinity_calculator.1} parent=5 // pred_fallthru
      _
    %p857 = scmp.le.s32.totalorder 2, %s14
    // Predicated region
    $region53: #{affinity_calculator.1} parent=5 // pred_check
      %p858 = pneg %p857
    $region54: #{affinity_calculator.1} parent=5 // pred_check_branch
      %860 = sbr.rel (%p858) target = $region56
    $region55: #{affinity_calculator.1} parent=5 // pred_region
      %s861 = ssub.s32 %s14, 2
      // Predicated region
      $region57: #{affinity_calculator.1} parent=55 // pred_check
        %p862 = pneg %p200
      $region58: #{affinity_calculator.1} parent=55 // pred_check_branch
        %864 = sbr.rel (%p862) target = $region60
      $region59: #{affinity_calculator.1} parent=55 // pred_region
        %p865 = scmp.lt.s32.totalorder %s20, 1
        %s866 = scalar_select %p865, %s20, 1
        %s867 = scalar_lea.vmem %s7, %s866
      $region60: #{affinity_calculator.1} parent=55 // pred_fallthru
        _
    $region56: #{affinity_calculator.1} parent=5 // pred_fallthru
      _
  $region6: #{affinity_calculator.1} parent=0 // loop_footer
    %s18 = sadd.s32 1, %s14
  $region7: #{affinity_calculator.1} parent=0 // loop_footer_branch
    %13 = sbr.rel target = $region3
  $region8: #{affinity_calculator.1} parent=0 // loop_exit
    _

</llo_original>
